<compile_context>
chip_gen: v5e
topology: v5e:2x2
jax: 0.10.0
libtpu: 0.0.40
codegen_flags: <defaults>
</compile_context>

<pallas_src>
import math

import jax
import jax.numpy as jnp
from jax.experimental import pallas as pl
from jax.experimental.pallas import tpu as pltpu

LANES = 128


def _pow(v, gamma):
    # Integer fast path keeps the single EUP free for the log2s (a float
    # `** gamma` lowers to exp+log and would flip the kernel EUP-bound).
    if isinstance(gamma, int) or float(gamma).is_integer():
        g = int(gamma)
        if g == 0:
            return jnp.ones_like(v)
        if 1 <= g <= 4:
            out = v
            for _ in range(g - 1):
                out = out * v
            return out
    return v ** gamma


def _focal_terms(x, y, alpha, gamma, hard_labels):
    """Per-element focal loss terms (used both in-kernel and for the tail)."""
    x = x.astype(jnp.float32)
    y = y.astype(jnp.float32)
    if hard_labels:
        # Single-log2 trick — only valid when labels are exactly 0/1.
        t = jnp.where(y > 0.5, x, 1.0 - x)
        w = jnp.where(y > 0.5, alpha, 1.0 - alpha)
        return -w * _pow(1.0 - t, gamma) * jnp.log2(t)
    p1 = (-alpha) * _pow(1.0 - x, gamma) * jnp.log2(x) * y
    p0 = (alpha - 1.0) * _pow(x, gamma) * jnp.log2(1.0 - x) * (1.0 - y)
    return p0 + p1


def _make_focal_kernel(alpha, gamma, hard_labels, tile_rows):
    def kernel(x_ref, y_ref, out_ref):
        # out_ref is the same (8,128) block for every inner grid step ->
        # resident VMEM accumulator for this core's share of the rows.
        @pl.when(pl.program_id(1) == 0)
        def _init():
            out_ref[...] = jnp.zeros_like(out_ref)

        loss = _focal_terms(x_ref[...], y_ref[...], alpha, gamma, hard_labels)
        # Fold row-groups of 8 onto the (8,128) accumulator: pure VPU adds.
        out_ref[...] += loss.reshape(tile_rows // 8, 8, LANES).sum(axis=0)

    return kernel


def focal_loss(logits, label, *, alpha=0.25, gamma=2,
               tile_rows=4096, core_splits=None, hard_labels=False):
    """FocalLoss.forward (always a scalar sum) as a Pallas TPU kernel."""
    assert logits.shape == label.shape
    alpha = float(alpha)
    total = math.prod(logits.shape)

    x_flat = logits.reshape(-1)   # free bitcast
    y_flat = label.reshape(-1)

    rows = total // LANES
    tail = total % LANES

    # Sublane alignment of the input blocks (f32 -> 8, bf16 -> 16, int8 -> 32).
    row_align = max(8,
                    32 // jnp.dtype(logits.dtype).itemsize,
                    32 // jnp.dtype(label.dtype).itemsize)

    rup = lambda a, b: -(-a // b) * b
    rdown = lambda a, b: (a // b) * b

    tile_rows_eff = min(rup(max(int(tile_rows), row_align), row_align),
                        rdown(rows, row_align))

    main_rows = 0
    main_sum = jnp.float32(0.0)
    if tile_rows_eff >= row_align:
        num_tiles = rows // tile_rows_eff
        if core_splits is None:
            cs = 2 if num_tiles >= 2 else 1        # megacore split only if useful
        else:
            cs = max(1, min(int(core_splits), num_tiles))
        tiles_per_core = num_tiles // cs
        main_rows = cs * tiles_per_core * tile_rows_eff

    if main_rows > 0:
        if tail:
            # Unavoidable copy only when numel % 128 != 0 (to get a lane-dense
            # 2-D view); when numel is 128-aligned the reshape below is free.
            x2d = x_flat[: rows * LANES].reshape(rows, LANES)
            y2d = y_flat[: rows * LANES].reshape(rows, LANES)
        else:
            x2d = x_flat.reshape(rows, LANES)
            y2d = y_flat.reshape(rows, LANES)

        in_map = lambda c, i: (c * tiles_per_core + i, 0)

        cparams = dict(dimension_semantics=("parallel", "arbitrary"))
        blk_bytes = tile_rows_eff * LANES * (jnp.dtype(logits.dtype).itemsize
                                             + jnp.dtype(label.dtype).itemsize)
        vmem_need = 2 * blk_bytes + (1 << 20)      # double-buffered inputs + slack
        if vmem_need > (16 << 20):
            cparams["vmem_limit_bytes"] = int(vmem_need + (4 << 20))

        partials = pl.pallas_call(
            _make_focal_kernel(alpha, gamma, hard_labels, tile_rows_eff),
            out_shape=jax.ShapeDtypeStruct((cs, 8, LANES), jnp.float32),
            grid_spec=pltpu.PrefetchScalarGridSpec(
                num_scalar_prefetch=0,
                grid=(cs, tiles_per_core),
                in_specs=[
                    pl.BlockSpec((tile_rows_eff, LANES), in_map),
                    pl.BlockSpec((tile_rows_eff, LANES), in_map),
                ],
                out_specs=pl.BlockSpec((None, 8, LANES), lambda c, i: (c, 0, 0)),
            ),
            compiler_params=pltpu.CompilerParams(**cparams),
        )(x2d, y2d)

        main_sum = jnp.sum(partials)

    # Ragged remainder (rows not covered by full tiles + the sub-128 tail):
    # tiny, handled with plain jnp on a small suffix slice.
    start = main_rows * LANES
    if start < total:
        rest = _focal_terms(x_flat[start:total], y_flat[start:total],
                            alpha, gamma, hard_labels)
        rest_sum = jnp.sum(rest)
    else:
        rest_sum = jnp.float32(0.0)

    return main_sum + rest_sum


def focal_loss_ref(logits, label, alpha=0.25, gamma=2):
    x = logits.astype(jnp.float32)
    y = label.astype(jnp.float32)
    p1 = -alpha * (1.0 - x) ** gamma * jnp.log2(x) * y
    p0 = -(1.0 - alpha) * x ** gamma * jnp.log2(1.0 - x) * (1.0 - y)
    return jnp.sum(p0 + p1)


if __name__ == "__main__":
    key = jax.random.PRNGKey(0)

    # NCHW like the PyTorch module; "logits" must be probabilities in (0,1)
    # for log2(logits) / log2(1-logits) to stay finite (the module does not
    # clamp either, so semantics are preserved).
    cases = [
        ((2, 4, 16, 16), {}),                 # 128-aligned, single tile
        ((2, 3, 17, 17), {}),                 # ragged -> jnp remainder path
        ((4, 8, 64, 64), {"tile_rows": 256}), # multi-tile grid + 2-way split
    ]
    ok = True
    for shape, kw in cases:
        key, k1, k2 = jax.random.split(key, 3)
        logits = jax.random.uniform(k1, shape, dtype=jnp.float32,
                                    minval=0.05, maxval=0.95)
        label = (jax.random.uniform(k2, shape) > 0.5).astype(jnp.float32)

        out = jax.block_until_ready(focal_loss(logits, label, **kw))
        ref = focal_loss_ref(logits, label)
        assert jnp.allclose(out, ref, rtol=1e-5, atol=1e-3), (shape, out, ref)

        # Hard-label fast path (labels are exactly 0/1 here).
        out_h = jax.block_until_ready(
            focal_loss(logits, label, hard_labels=True, **kw))
        assert jnp.allclose(out_h, ref, rtol=1e-5, atol=1e-3), (shape, out_h, ref)

    print("KERNEL_OK")
</pallas_src>

<mosaic_0001>
module attributes {stable_mosaic.version = 11 : i64} {
  func.func @kernel(%arg0: i32, %arg1: i32, %arg2: memref<16x128xf32, #tpu.memory_space<vmem>>, %arg3: memref<16x128xf32, #tpu.memory_space<vmem>>, %arg4: memref<1x8x128xf32, #tpu.memory_space<vmem>>) attributes {dimension_semantics = [#tpu.dimension_semantics<parallel>, #tpu.dimension_semantics<arbitrary>], iteration_bounds = array<i64: 1, 1>, scalar_prefetch = 0 : i64, scratch_operands = 0 : i64, tpu.core_type = #tpu.core_type<tc>, window_params = [{transform_indices = @transform_0, window_bounds = array<i64: 16, 128>}, {transform_indices = @transform_1, window_bounds = array<i64: 16, 128>}, {transform_indices = @transform_2, window_bounds = array<i64: 1, 8, 128>}]} {
    %c0_i32 = arith.constant 0 : i32
    %0 = arith.cmpi eq, %arg1, %c0_i32 : i32
    %1 = arith.extui %0 : i1 to i32
    %c0_i32_0 = arith.constant 0 : i32
    %2 = arith.cmpi ne, %1, %c0_i32_0 : i32
    scf.if %2 {
      %cst_17 = arith.constant 0.000000e+00 : f32
      %38 = vector.broadcast %cst_17 : f32 to vector<8x128xf32>
      %c0_18 = arith.constant 0 : index
      %c0_19 = arith.constant 0 : index
      %c0_20 = arith.constant 0 : index
      %39 = vector.load %arg4[%c0_18, %c0_19, %c0_20] : memref<1x8x128xf32, #tpu.memory_space<vmem>>, vector<1x8x128xf32>
      %40 = vector.shape_cast %39 : vector<1x8x128xf32> to vector<8x128xf32>
      %41 = vector.shape_cast %38 : vector<8x128xf32> to vector<1x8x128xf32>
      tpu.vector_store %arg4[%c0_18, %c0_19, %c0_20], %41 {strides = array<i32>} : memref<1x8x128xf32, #tpu.memory_space<vmem>>, vector<1x8x128xf32>,
    } else {
    }
    %c0 = arith.constant 0 : index
    %c0_1 = arith.constant 0 : index
    %3 = vector.load %arg2[%c0, %c0_1] : memref<16x128xf32, #tpu.memory_space<vmem>>, vector<16x128xf32>
    %c0_2 = arith.constant 0 : index
    %c0_3 = arith.constant 0 : index
    %4 = vector.load %arg3[%c0_2, %c0_3] : memref<16x128xf32, #tpu.memory_space<vmem>>, vector<16x128xf32>
    %cst = arith.constant 1.000000e+00 : f32
    %5 = vector.broadcast %cst : f32 to vector<16x128xf32>
    %6 = arith.subf %5, %3 : vector<16x128xf32>
    %7 = arith.mulf %6, %6 : vector<16x128xf32>
    %cst_4 = arith.constant -2.500000e-01 : f32
    %8 = vector.broadcast %cst_4 : f32 to vector<16x128xf32>
    %9 = arith.mulf %8, %7 : vector<16x128xf32>
    %10 = math.log %3 : vector<16x128xf32>
    %cst_5 = arith.constant 2.000000e+00 : f32
    %11 = math.log %cst_5 : f32
    %12 = vector.broadcast %11 : f32 to vector<16x128xf32>
    %13 = arith.divf %10, %12 : vector<16x128xf32>
    %14 = arith.mulf %9, %13 : vector<16x128xf32>
    %15 = arith.mulf %14, %4 : vector<16x128xf32>
    %16 = arith.mulf %3, %3 : vector<16x128xf32>
    %cst_6 = arith.constant -7.500000e-01 : f32
    %17 = vector.broadcast %cst_6 : f32 to vector<16x128xf32>
    %18 = arith.mulf %17, %16 : vector<16x128xf32>
    %cst_7 = arith.constant 1.000000e+00 : f32
    %19 = vector.broadcast %cst_7 : f32 to vector<16x128xf32>
    %20 = arith.subf %19, %3 : vector<16x128xf32>
    %21 = math.log %20 : vector<16x128xf32>
    %cst_8 = arith.constant 2.000000e+00 : f32
    %22 = math.log %cst_8 : f32
    %23 = vector.broadcast %22 : f32 to vector<16x128xf32>
    %24 = arith.divf %21, %23 : vector<16x128xf32>
    %25 = arith.mulf %18, %24 : vector<16x128xf32>
    %cst_9 = arith.constant 1.000000e+00 : f32
    %26 = vector.broadcast %cst_9 : f32 to vector<16x128xf32>
    %27 = arith.subf %26, %4 : vector<16x128xf32>
    %28 = arith.mulf %25, %27 : vector<16x128xf32>
    %29 = arith.addf %28, %15 : vector<16x128xf32>
    %c0_10 = arith.constant 0 : index
    %c0_11 = arith.constant 0 : index
    %c0_12 = arith.constant 0 : index
    %30 = vector.load %arg4[%c0_10, %c0_11, %c0_12] : memref<1x8x128xf32, #tpu.memory_space<vmem>>, vector<1x8x128xf32>
    %31 = vector.shape_cast %30 : vector<1x8x128xf32> to vector<8x128xf32>
    %32 = vector.shape_cast %29 : vector<16x128xf32> to vector<2x8x128xf32>
    %cst_13 = arith.constant dense<0.000000e+00> : vector<8x128xf32>
    %33 = vector.multi_reduction <add>, %32, %cst_13 [0] : vector<2x8x128xf32> to vector<8x128xf32>
    %34 = arith.addf %31, %33 : vector<8x128xf32>
    %c0_14 = arith.constant 0 : index
    %c0_15 = arith.constant 0 : index
    %c0_16 = arith.constant 0 : index
    %35 = vector.load %arg4[%c0_14, %c0_15, %c0_16] : memref<1x8x128xf32, #tpu.memory_space<vmem>>, vector<1x8x128xf32>
    %36 = vector.shape_cast %35 : vector<1x8x128xf32> to vector<8x128xf32>
    %37 = vector.shape_cast %34 : vector<8x128xf32> to vector<1x8x128xf32>
    tpu.vector_store %arg4[%c0_14, %c0_15, %c0_16], %37 {strides = array<i32>} : memref<1x8x128xf32, #tpu.memory_space<vmem>>, vector<1x8x128xf32>,
    return
  }
  func.func @transform_0(%arg0: i32, %arg1: i32) -> (i32, i32) {
    %c1_i32 = arith.constant 1 : i32
    %0 = arith.muli %arg0, %c1_i32 : i32
    %1 = arith.addi %0, %arg1 : i32
    %c0_i32 = arith.constant 0 : i32
    %c0_i32_0 = arith.constant 0 : i32
    return %1, %c0_i32 : i32, i32
  }
  func.func @transform_1(%arg0: i32, %arg1: i32) -> (i32, i32) {
    %c1_i32 = arith.constant 1 : i32
    %0 = arith.muli %arg0, %c1_i32 : i32
    %1 = arith.addi %0, %arg1 : i32
    %c0_i32 = arith.constant 0 : i32
    %c0_i32_0 = arith.constant 0 : i32
    return %1, %c0_i32 : i32, i32
  }
  func.func @transform_2(%arg0: i32, %arg1: i32) -> (i32, i32, i32) {
    %c0_i32 = arith.constant 0 : i32
    %c0_i32_0 = arith.constant 0 : i32
    %c0_i32_1 = arith.constant 0 : i32
    return %arg0, %c0_i32, %c0_i32_0 : i32, i32, i32
  }
}

</mosaic_0001>

<llo_original>
// kernel: tpu_custom_call.1
$region0: #{tpu_custom_call.1}
  #allocation0 [shape = 'u32[]', space=smem, size = 0x4, offset = 0x4, fixed_abs, tag = 'smem constant byte address 0x4 - core index']
  #allocation1 [shape = 'u32[72,128]{1,0:T(1,128)}', space=vmem, size = 0x9000, scoped, tag = 'internal scratch']
  %s0 = inlined_call_operand.hbm [shape: f32[16,128], index: 0, kind: input, shape index: {}]
  %s1 = inlined_call_operand.hbm [shape: f32[16,128], index: 1, kind: input, shape index: {}]
  %s2 = inlined_call_operand.hbm [shape: f32[1,8,128], index: 2, kind: output, shape index: {}]
  %s3 = sld [smem:[#allocation0]]
  $region30: #{tpu_custom_call.1} parent=0
    _
  %s5 = ssub.s32 1, %s3
  %s6 = scalar_select 0, %s5, %s3
  $region1: #{tpu_custom_call.1} parent=0
    #allocation2 [shape = 'u8[8192]{0}', space=vmem, size = 0x2000, scoped, tag = 'input window, operand 0, single buffered']
    #allocation3 [shape = 's32[1]{0}', space=sflag, size = 0x4, scoped, tag = 'scoped memory for tpu_custom_call.1']
    #allocation4 [shape = 's32[1]{0}', space=sflag, size = 0x4, scoped, tag = 'scoped memory for tpu_custom_call.1']
    #allocation5 [shape = 'u8[8192]{0}', space=vmem, size = 0x2000, scoped, tag = 'input window, operand 1, single buffered']
    #allocation6 [shape = 's32[1]{0}', space=sflag, size = 0x4, scoped, tag = 'scoped memory for tpu_custom_call.1']
    #allocation7 [shape = 'u8[4096]{0}', space=vmem, size = 0x1000, scoped, tag = 'output window, operand 0, single buffered']
    %7 = vsyncpa [#allocation3], 0
    %8 = vsyncpa [#allocation6], 0
    %9 = vsyncpa [#allocation4], 0
    // Predicated region
    $region2: #{tpu_custom_call.1} parent=1 // pred_check
      _
    $region3: #{tpu_custom_call.1} parent=1 // pred_check_branch
      %11 = sbr.rel (0) target = $region5
    $region4: #{tpu_custom_call.1} parent=1 // pred_region
      %s12 = sadd.s32 0, 0
      %s13 = smul.u32 2, %s12
      %15 = vsyncadd [#allocation3], 0
      %s16 = smul.addr %s13, 8
      %s17 = scalar_lea.hbm %s0, %s16
      %s18 = sshll.u32 %s17, 4
      %s19 = int_to_ptr.hbm [resolvable:$true] %s18
      %s20 = sshll.u32 [#allocation2], 4
      %s21 = int_to_ptr.vmem [resolvable:$true] %s20
      %26 = dma.hbm_to_vmem [thread:$0]  %s19, 256, %s21, [#allocation3], 128, 128, 8
    $region5: #{tpu_custom_call.1} parent=1 // pred_fallthru
      _
    // Predicated region
    $region6: #{tpu_custom_call.1} parent=1 // pred_check
      _
    $region7: #{tpu_custom_call.1} parent=1 // pred_check_branch
      %28 = sbr.rel (0) target = $region9
    $region8: #{tpu_custom_call.1} parent=1 // pred_region
      %s29 = sadd.s32 0, 0
      %s30 = smul.u32 2, %s29
      %32 = vsyncadd [#allocation6], 0
      %s33 = smul.addr %s30, 8
      %s34 = scalar_lea.hbm %s1, %s33
      %s35 = sshll.u32 %s34, 4
      %s36 = int_to_ptr.hbm [resolvable:$true] %s35
      %s37 = sshll.u32 [#allocation5], 4
      %s38 = int_to_ptr.vmem [resolvable:$true] %s37
      %43 = dma.hbm_to_vmem [thread:$0]  %s36, 256, %s38, [#allocation6], 128, 128, 8
    $region9: #{tpu_custom_call.1} parent=1 // pred_fallthru
      _
    // Predicated region
    $region10: #{tpu_custom_call.1} parent=1 // pred_check
      _
    $region11: #{tpu_custom_call.1} parent=1 // pred_check_branch
      %45 = sbr.rel (0) target = $region13
    $region12: #{tpu_custom_call.1} parent=1 // pred_region
      %47 = dma.done [#allocation3], 256
    $region13: #{tpu_custom_call.1} parent=1 // pred_fallthru
      _
    // Predicated region
    $region14: #{tpu_custom_call.1} parent=1 // pred_check
      _
    $region15: #{tpu_custom_call.1} parent=1 // pred_check_branch
      %49 = sbr.rel (0) target = $region17
    $region16: #{tpu_custom_call.1} parent=1 // pred_region
      %51 = dma.done [#allocation6], 256
    $region17: #{tpu_custom_call.1} parent=1 // pred_fallthru
      _
    %s52 = sadd.s32 0, 0
    %s53 = smul.u32 2, %s52
    %s54 = sadd.s32 0, 0
    %s55 = smul.u32 2, %s54
    %p56 = scmp.eq.s32.totalorder 0, 0
    // Predicated region
    $region18: #{tpu_custom_call.1} parent=1 // pred_check
      %p57 = pneg %p56
    $region19: #{tpu_custom_call.1} parent=1 // pred_check_branch
      %59 = sbr.rel (%p57) target = $region21
    $region20: #{tpu_custom_call.1} parent=1 // pred_region
      %60 = vst [vmem:[#allocation7] sm:$0xff] 0.0
    $region21: #{tpu_custom_call.1} parent=1 // pred_fallthru
      _
    %v61 = vld [vmem:[#allocation2] sm:$0xff]
    %v62 = vld [vmem:[#allocation2 + $0x8] sm:$0xff]
    %v63 = vld [vmem:[#allocation5] sm:$0xff]
    %v64 = vld [vmem:[#allocation5 + $0x8] sm:$0xff]
    %v65 = vsub.f32 1.0, %v61
    %v66 = vsub.f32 1.0, %v62
    %v67 = vmul.f32 %v65, %v65
    %v68 = vmul.f32 %v66, %v66
    %v69 = vmul.f32 %v67, -0.25
    %v70 = vmul.f32 %v68, -0.25
    %v71 = vlog2.pop %v61
    %v72 = vmul.f32 %v71, 0.6931472
    %v73 = vlog2.pop %v62
    %v74 = vmul.f32 %v73, 0.6931472
    %v75 = vrcp.pop 0.6931472
    %v76 = vmul.f32 0.6931472, %v75
    %v77 = vsub.f32 1.0, %v76
    %v78 = vmul.f32 %v75, %v77
    %v79 = vadd.f32 %v75, %v78
    %vm80 = vweird.f32 %v75
    %v81 = vsel %vm80, %v75, %v79
    %v82 = vmul.f32 %v72, %v81
    %v83 = vmul.f32 %v74, %v81
    %v84 = vmul.f32 %v69, %v82
    %v85 = vmul.f32 %v70, %v83
    %v86 = vmul.f32 %v84, %v63
    %v87 = vmul.f32 %v85, %v64
    %v88 = vmul.f32 %v61, %v61
    %v89 = vmul.f32 %v62, %v62
    %v90 = vmul.f32 %v88, -0.75
    %v91 = vmul.f32 %v89, -0.75
    %v92 = vlog2.pop %v65
    %v93 = vmul.f32 %v92, 0.6931472
    %v94 = vlog2.pop %v66
    %v95 = vmul.f32 %v94, 0.6931472
    %v96 = vmul.f32 %v93, %v81
    %v97 = vmul.f32 %v95, %v81
    %v98 = vmul.f32 %v90, %v96
    %v99 = vmul.f32 %v91, %v97
    %v100 = vsub.f32 1.0, %v63
    %v101 = vsub.f32 1.0, %v64
    %v102 = vmul.f32 %v98, %v100
    %v103 = vmul.f32 %v99, %v101
    %v104 = vadd.f32 %v102, %v86
    %v105 = vadd.f32 %v103, %v87
    %v106 = vld [vmem:[#allocation7] sm:$0xff]
    %v107 = vadd.f32 %v104, %v105
    %v108 = vadd.f32 %v106, %v107
    %109 = vst [vmem:[#allocation7] sm:$0xff] %v108
    // Predicated region
    $region22: #{tpu_custom_call.1} parent=1 // pred_check
      _
    $region23: #{tpu_custom_call.1} parent=1 // pred_check_branch
      %111 = sbr.rel (0) target = $region25
    $region24: #{tpu_custom_call.1} parent=1 // pred_region
      %113 = vsyncadd [#allocation4], 0
      %s115 = sshll.u32 [#allocation7], 4
      %s116 = int_to_ptr.vmem [resolvable:$true] %s115
      %s117 = sshll.u32 %s2, 4
      %s118 = int_to_ptr.hbm [resolvable:$true] %s117
      %120 = dma.vmem_to_hbm [thread:$0]  %s116, 128, %s118, [#allocation4]
    $region25: #{tpu_custom_call.1} parent=1 // pred_fallthru
      _
    // Predicated region
    $region26: #{tpu_custom_call.1} parent=1 // pred_check
      _
    $region27: #{tpu_custom_call.1} parent=1 // pred_check_branch
      %122 = sbr.rel (0) target = $region29
    $region28: #{tpu_custom_call.1} parent=1 // pred_region
      %124 = dma.done [#allocation4], 128
    $region29: #{tpu_custom_call.1} parent=1 // pred_fallthru
      _
    %125 = vsyncpa [#allocation3], 1
    %126 = vsyncpa [#allocation6], 1
    %127 = vsyncpa [#allocation4], 1

</llo_original>
